<compile_context>
chip_gen: v6e
topology: v6e:2x2x1
jax: 0.10.0
libtpu: 0.0.40
codegen_flags: <defaults>
</compile_context>

<pallas_src>
import functools

import jax
import jax.numpy as jnp
from jax.experimental import pallas as pl
from jax.experimental.pallas import tpu as pltpu


def _blur_kernel(x_ref, w_ref, o_ref, pad_ref, *, scale, per_channel_uniform):
    """Depthwise 3x3 blur (padding=1) on one (TB, H, W) block.

    x_ref:   (TB, H, W)      input block; TB tiles the merged N*C axis (VMEM)
    w_ref:   (TB, 3, 3)      per-row (= per (n, c)) taps (VMEM)
    o_ref:   (TB, H, W)      output block (VMEM)
    pad_ref: (TB, H+2, W+2)  scratch in the input dtype; 1-pixel zero halo
    """
    TB, H, W = o_ref.shape

    # Zero only the halo (rows 0 / H+1, cols 0 / W+1); the interior is fully
    # overwritten below, so no full-slab zero fill per grid step.
    zrow = jnp.zeros((TB, 1, W + 2), pad_ref.dtype)
    zcol = jnp.zeros((TB, H + 2, 1), pad_ref.dtype)
    pad_ref[:, 0:1, :] = zrow
    pad_ref[:, H + 1:H + 2, :] = zrow
    pad_ref[:, :, 0:1] = zcol
    pad_ref[:, :, W + 1:W + 2] = zcol

    # Interior copy stays in the input dtype (halves scratch bytes for bf16).
    pad_ref[:, 1:H + 1, 1:W + 1] = x_ref[...]

    need_w = scale is None
    w = w_ref[...].astype(jnp.float32) if need_w else None  # (TB, 3, 3)

    # 3x3 depthwise conv = 9 statically shifted slices; accumulate in f32.
    acc = None
    for ki in range(3):
        for kj in range(3):
            t = pad_ref[:, ki:ki + H, kj:kj + W].astype(jnp.float32)
            if need_w and not per_channel_uniform:
                t = t * w[:, ki:ki + 1, kj:kj + 1]
            acc = t if acc is None else acc + t

    if scale is not None:
        # All taps identical (the module's 1/9 fill): 8 adds + 1 mul total.
        acc = acc * jnp.float32(scale)
    elif per_channel_uniform:
        acc = acc * w[:, 0:1, 0:1]

    o_ref[...] = acc.astype(o_ref.dtype)


def gaussian_blur(x, weight, *, target_block_bytes=4 << 20):
    """Equivalent of F.conv2d(x, weight, padding=1, groups=x.shape[1]).

    x:      (N, C, H, W)  -- kept in native NCHW layout end to end
    weight: (C, 1, 3, 3)
    """
    N, C, H, W = x.shape
    assert weight.shape == (C, 1, 3, 3)
    B = N * C

    # Free, contiguous reshapes (no HBM transpose passes).
    xb = x.reshape(B, H, W)
    w33 = weight[:, 0]                                             # (C, 3, 3)
    wb = jnp.broadcast_to(w33[None], (N, C, 3, 3)).reshape(B, 3, 3)

    # Static specialization of the tap weights (the module fills them 1/9).
    scale = None
    per_channel_uniform = False
    try:
        if bool(jnp.all(w33 == w33[0, 0, 0])):
            scale = float(w33[0, 0, 0])
        elif bool(jnp.all(w33 == w33[:, :1, :1])):
            per_channel_uniform = True
    except jax.errors.ConcretizationTypeError:
        pass  # abstract weights under tracing: use the general per-tap path

    # Dtype-aware block sizing: largest divisor of B whose input block fits the
    # budget, while keeping >= 2 grid steps when possible (v7x megacore).
    itemsize = x.dtype.itemsize
    bytes_per_b = H * W * itemsize
    cap = max(1, int(target_block_bytes // max(bytes_per_b, 1)))
    divisors = [d for d in range(1, B + 1) if B % d == 0 and d <= cap]
    if not divisors:
        divisors = [1]
    multi = [d for d in divisors if B // d >= 2]
    tb = max(multi) if multi else max(divisors)
    grid = (B // tb,)

    # TODO(synk): for planes so large that even tb == 1 exceeds the VMEM budget
    # (or B == 1), add H-tiling with an explicit 2-row halo via a manual
    # make_async_copy of TH+2 rows into the scratch.

    kernel = functools.partial(
        _blur_kernel, scale=scale, per_channel_uniform=per_channel_uniform)

    out_b = pl.pallas_call(
        kernel,
        out_shape=jax.ShapeDtypeStruct((B, H, W), x.dtype),
        grid_spec=pltpu.PrefetchScalarGridSpec(
            num_scalar_prefetch=0,
            grid=grid,
            in_specs=[
                pl.BlockSpec((tb, H, W), lambda i: (i, 0, 0)),
                pl.BlockSpec((tb, 3, 3), lambda i: (i, 0, 0)),
            ],
            out_specs=pl.BlockSpec((tb, H, W), lambda i: (i, 0, 0)),
            scratch_shapes=[pltpu.VMEM((tb, H + 2, W + 2), x.dtype)],
        ),
        compiler_params=pltpu.CompilerParams(
            dimension_semantics=("parallel",),
            vmem_limit_bytes=48 * 1024 * 1024,
        ),
    )(xb, wb)

    return out_b.reshape(N, C, H, W)


def _reference_blur(x, weight):
    # Pure-JAX reference: depthwise conv via shifted sums (NCHW).
    N, C, H, W = x.shape
    xp = jnp.pad(x.astype(jnp.float32), ((0, 0), (0, 0), (1, 1), (1, 1)))
    out = jnp.zeros((N, C, H, W), jnp.float32)
    for ki in range(3):
        for kj in range(3):
            w = weight[:, 0, ki, kj].reshape(1, C, 1, 1).astype(jnp.float32)
            out = out + w * xp[:, :, ki:ki + H, kj:kj + W]
    return out.astype(x.dtype)


if __name__ == "__main__":
    key = jax.random.PRNGKey(0)
    N, C, H, W = 2, 4, 16, 16
    x = jax.random.normal(key, (N, C, H, W), dtype=jnp.float32)

    # Deterministic parameter init matching the PyTorch module:
    # weight of shape (channels, 1, 3, 3) filled with 1/9, non-trainable.
    weight = jnp.full((C, 1, 3, 3), 1.0 / 9.0, dtype=jnp.float32)

    out = gaussian_blur(x, weight)
    out = jax.block_until_ready(out)

    ref = _reference_blur(x, weight)
    assert out.shape == (N, C, H, W)
    assert jnp.allclose(out, ref, atol=1e-5, rtol=1e-5)

    print("KERNEL_OK")
</pallas_src>

<mosaic_0001>
module attributes {stable_mosaic.version = 11 : i64} {
  func.func @_blur_kernel(%arg0: i32, %arg1: memref<4x16x16xf32, #tpu.memory_space<vmem>>, %arg2: memref<4x3x3xf32, #tpu.memory_space<vmem>>, %arg3: memref<4x16x16xf32, #tpu.memory_space<vmem>>, %arg4: memref<4x18x18xf32, #tpu.memory_space<vmem>>) attributes {dimension_semantics = [#tpu.dimension_semantics<parallel>], iteration_bounds = array<i64: 2>, scalar_prefetch = 0 : i64, scratch_operands = 1 : i64, tpu.core_type = #tpu.core_type<tc>, window_params = [{transform_indices = @transform_0, window_bounds = array<i64: 4, 16, 16>}, {transform_indices = @transform_1, window_bounds = array<i64: 4, 3, 3>}, {transform_indices = @transform_2, window_bounds = array<i64: 4, 16, 16>}]} {
    %cst = arith.constant 0.000000e+00 : f32
    %0 = vector.broadcast %cst : f32 to vector<4x1x18xf32>
    %cst_0 = arith.constant 0.000000e+00 : f32
    %1 = vector.broadcast %cst_0 : f32 to vector<4x18x1xf32>
    %c0 = arith.constant 0 : index
    %c0_1 = arith.constant 0 : index
    %c0_2 = arith.constant 0 : index
    %2 = vector.load %arg4[%c0, %c0_1, %c0_2] : memref<4x18x18xf32, #tpu.memory_space<vmem>>, vector<4x1x18xf32>
    tpu.vector_store %arg4[%c0, %c0_1, %c0_2], %0 {strides = array<i32>} : memref<4x18x18xf32, #tpu.memory_space<vmem>>, vector<4x1x18xf32>,
    %c0_3 = arith.constant 0 : index
    %c17 = arith.constant 17 : index
    %c0_4 = arith.constant 0 : index
    %3 = vector.load %arg4[%c0_3, %c17, %c0_4] : memref<4x18x18xf32, #tpu.memory_space<vmem>>, vector<4x1x18xf32>
    tpu.vector_store %arg4[%c0_3, %c17, %c0_4], %0 {strides = array<i32>} : memref<4x18x18xf32, #tpu.memory_space<vmem>>, vector<4x1x18xf32>,
    %c0_5 = arith.constant 0 : index
    %c0_6 = arith.constant 0 : index
    %c0_7 = arith.constant 0 : index
    %4 = vector.load %arg4[%c0_5, %c0_6, %c0_7] : memref<4x18x18xf32, #tpu.memory_space<vmem>>, vector<4x18x1xf32>
    tpu.vector_store %arg4[%c0_5, %c0_6, %c0_7], %1 {strides = array<i32>} : memref<4x18x18xf32, #tpu.memory_space<vmem>>, vector<4x18x1xf32>,
    %c0_8 = arith.constant 0 : index
    %c0_9 = arith.constant 0 : index
    %c17_10 = arith.constant 17 : index
    %5 = vector.load %arg4[%c0_8, %c0_9, %c17_10] : memref<4x18x18xf32, #tpu.memory_space<vmem>>, vector<4x18x1xf32>
    tpu.vector_store %arg4[%c0_8, %c0_9, %c17_10], %1 {strides = array<i32>} : memref<4x18x18xf32, #tpu.memory_space<vmem>>, vector<4x18x1xf32>,
    %c0_11 = arith.constant 0 : index
    %c0_12 = arith.constant 0 : index
    %c0_13 = arith.constant 0 : index
    %6 = vector.load %arg1[%c0_11, %c0_12, %c0_13] : memref<4x16x16xf32, #tpu.memory_space<vmem>>, vector<4x16x16xf32>
    %c0_14 = arith.constant 0 : index
    %c1 = arith.constant 1 : index
    %c1_15 = arith.constant 1 : index
    %7 = vector.load %arg4[%c0_14, %c1, %c1_15] : memref<4x18x18xf32, #tpu.memory_space<vmem>>, vector<4x16x16xf32>
    tpu.vector_store %arg4[%c0_14, %c1, %c1_15], %6 {strides = array<i32>} : memref<4x18x18xf32, #tpu.memory_space<vmem>>, vector<4x16x16xf32>,
    %c0_16 = arith.constant 0 : index
    %c0_17 = arith.constant 0 : index
    %c0_18 = arith.constant 0 : index
    %8 = vector.load %arg4[%c0_16, %c0_17, %c0_18] : memref<4x18x18xf32, #tpu.memory_space<vmem>>, vector<4x16x16xf32>
    %c0_19 = arith.constant 0 : index
    %c0_20 = arith.constant 0 : index
    %c1_21 = arith.constant 1 : index
    %9 = vector.load %arg4[%c0_19, %c0_20, %c1_21] : memref<4x18x18xf32, #tpu.memory_space<vmem>>, vector<4x16x16xf32>
    %10 = arith.addf %8, %9 : vector<4x16x16xf32>
    %c0_22 = arith.constant 0 : index
    %c0_23 = arith.constant 0 : index
    %c2 = arith.constant 2 : index
    %11 = vector.load %arg4[%c0_22, %c0_23, %c2] : memref<4x18x18xf32, #tpu.memory_space<vmem>>, vector<4x16x16xf32>
    %12 = arith.addf %10, %11 : vector<4x16x16xf32>
    %c0_24 = arith.constant 0 : index
    %c1_25 = arith.constant 1 : index
    %c0_26 = arith.constant 0 : index
    %13 = vector.load %arg4[%c0_24, %c1_25, %c0_26] : memref<4x18x18xf32, #tpu.memory_space<vmem>>, vector<4x16x16xf32>
    %14 = arith.addf %12, %13 : vector<4x16x16xf32>
    %c0_27 = arith.constant 0 : index
    %c1_28 = arith.constant 1 : index
    %c1_29 = arith.constant 1 : index
    %15 = vector.load %arg4[%c0_27, %c1_28, %c1_29] : memref<4x18x18xf32, #tpu.memory_space<vmem>>, vector<4x16x16xf32>
    %16 = arith.addf %14, %15 : vector<4x16x16xf32>
    %c0_30 = arith.constant 0 : index
    %c1_31 = arith.constant 1 : index
    %c2_32 = arith.constant 2 : index
    %17 = vector.load %arg4[%c0_30, %c1_31, %c2_32] : memref<4x18x18xf32, #tpu.memory_space<vmem>>, vector<4x16x16xf32>
    %18 = arith.addf %16, %17 : vector<4x16x16xf32>
    %c0_33 = arith.constant 0 : index
    %c2_34 = arith.constant 2 : index
    %c0_35 = arith.constant 0 : index
    %19 = vector.load %arg4[%c0_33, %c2_34, %c0_35] : memref<4x18x18xf32, #tpu.memory_space<vmem>>, vector<4x16x16xf32>
    %20 = arith.addf %18, %19 : vector<4x16x16xf32>
    %c0_36 = arith.constant 0 : index
    %c2_37 = arith.constant 2 : index
    %c1_38 = arith.constant 1 : index
    %21 = vector.load %arg4[%c0_36, %c2_37, %c1_38] : memref<4x18x18xf32, #tpu.memory_space<vmem>>, vector<4x16x16xf32>
    %22 = arith.addf %20, %21 : vector<4x16x16xf32>
    %c0_39 = arith.constant 0 : index
    %c2_40 = arith.constant 2 : index
    %c2_41 = arith.constant 2 : index
    %23 = vector.load %arg4[%c0_39, %c2_40, %c2_41] : memref<4x18x18xf32, #tpu.memory_space<vmem>>, vector<4x16x16xf32>
    %24 = arith.addf %22, %23 : vector<4x16x16xf32>
    %cst_42 = arith.constant 0.111111112 : f32
    %25 = vector.broadcast %cst_42 : f32 to vector<4x16x16xf32>
    %26 = arith.mulf %24, %25 : vector<4x16x16xf32>
    %c0_43 = arith.constant 0 : index
    %c0_44 = arith.constant 0 : index
    %c0_45 = arith.constant 0 : index
    %27 = vector.load %arg3[%c0_43, %c0_44, %c0_45] : memref<4x16x16xf32, #tpu.memory_space<vmem>>, vector<4x16x16xf32>
    tpu.vector_store %arg3[%c0_43, %c0_44, %c0_45], %26 {strides = array<i32>} : memref<4x16x16xf32, #tpu.memory_space<vmem>>, vector<4x16x16xf32>,
    return
  }
  func.func @transform_0(%arg0: i32) -> (i32, i32, i32) {
    %c0_i32 = arith.constant 0 : i32
    %c0_i32_0 = arith.constant 0 : i32
    %c0_i32_1 = arith.constant 0 : i32
    return %arg0, %c0_i32, %c0_i32_0 : i32, i32, i32
  }
  func.func @transform_1(%arg0: i32) -> (i32, i32, i32) {
    %c0_i32 = arith.constant 0 : i32
    %c0_i32_0 = arith.constant 0 : i32
    %c0_i32_1 = arith.constant 0 : i32
    return %arg0, %c0_i32, %c0_i32_0 : i32, i32, i32
  }
  func.func @transform_2(%arg0: i32) -> (i32, i32, i32) {
    %c0_i32 = arith.constant 0 : i32
    %c0_i32_0 = arith.constant 0 : i32
    %c0_i32_1 = arith.constant 0 : i32
    return %arg0, %c0_i32, %c0_i32_0 : i32, i32, i32
  }
}

</mosaic_0001>

<llo_original>
// kernel: tpu_custom_call.1
$region0: #{tpu_custom_call.1}
  #allocation0 [shape = 'u32[]', space=smem, size = 0x4, offset = 0x4, fixed_abs, tag = 'smem constant byte address 0x4 - core index']
  #allocation1 [shape = 'u32[144,128]{1,0:T(1,128)}', space=vmem, size = 0x12000, scoped, tag = 'internal scratch']
  #allocation2 [shape = 'f32[4,18,18]{2,1,0:T(8,128)}', space=vmem, size = 0xc000, scoped, tag = 'scratch operand']
  %s0 = inlined_call_operand.hbm [shape: f32[8,16,16], index: 0, kind: input, shape index: {}]
  %s1 = inlined_call_operand.vmem [shape: f32[8,3,3], index: 1, kind: input, shape index: {}]
  %s2 = inlined_call_operand.hbm [shape: f32[8,16,16], index: 2, kind: output, shape index: {}]
  %s3 = sld [smem:[#allocation0]]
  $region45: #{tpu_custom_call.1} parent=0
    _
  %s5 = ssub.s32 1, %s3
  %s6 = scalar_select 0, %s5, %s3
  $region1: #{tpu_custom_call.1} parent=0
    #allocation3 [shape = 'u8[65536]{0}', space=vmem, size = 0x10000, scoped, tag = 'input window, operand 0']
    #allocation4 [shape = 's32[2]{0}', space=sflag, size = 0x8, scoped, tag = 'scoped memory for tpu_custom_call.1']
    #allocation5 [shape = 's32[2]{0}', space=sflag, size = 0x8, scoped, tag = 'scoped memory for tpu_custom_call.1']
    #allocation6 [shape = 'u8[65536]{0}', space=vmem, size = 0x10000, scoped, tag = 'output window, operand 0']
    %7 = vsyncpa [#allocation4], 0
    %s8 = scalar_lea.sflag [#allocation4], 1
    %9 = vsyncpa %s8, 0
    %10 = vsyncpa [#allocation5], 0
    %s11 = scalar_lea.sflag [#allocation5], 1
    %12 = vsyncpa %s11, 0
    loop: start=0, step=1, limit=4
    $region2: #{tpu_custom_call.1} parent=1 // loop_pre_header
      _
    $region3: #{tpu_custom_call.1} parent=1 // loop_header
      %s14 = sphi 0, %s18
      %p15 = scmp.ge.s32.totalorder %s14, 4
      %s24 = sphi 0, %s26
      %s27 = sphi 0, %s24
      %s28 = sphi 0, %s27
      %s44 = sphi 0, %s28
      %s50 = sphi 0, %s52
      %s53 = sphi 0, %s50
      %s54 = sphi 0, %s53
      %s70 = sphi 0, %s54
      %s76 = sphi 0, %s78
      %s79 = sphi 0, %s76
      %s80 = sphi 0, %s79
      %s96 = sphi 0, %s80
    $region4: #{tpu_custom_call.1} parent=1 // loop_header_branch
      %17 = sbr.rel (%p15) target = $region8
    $region5: #{tpu_custom_call.1} parent=1 // loop_body
      %s19 = ssub.s32 %s14, 1
      %s20 = ssub.s32 %s14, 2
      %s21 = sadd.s32 %s14, 1
      %s22 = ssub.s32 %s14, %s21
      %p23 = scmp.eq.s32.totalorder %s22, 0
      %s25 = sadd.s32 %s24, 1
      %s26 = scalar_select %p23, %s24, %s25
      %p29 = pneg %p23
      %p30 = scmp.eq.s32.totalorder %s14, 1
      %p31 = por %p29, %p30
      %p32 = scmp.ne.s32.totalorder %s24, %s27
      %p33 = scmp.eq.s32.totalorder %s14, 0
      %p34 = por %p32, %p33
      %p35 = scmp.ne.s32.totalorder %s24, %s27
      %p36 = scmp.eq.s32.totalorder %s19, 1
      %p37 = por %p35, %p36
      %p38 = scmp.ne.s32.totalorder %s27, %s28
      %p39 = scmp.eq.s32.totalorder %s19, 0
      %p40 = por %p38, %p39
      %p41 = scmp.ne.s32.totalorder %s27, %s28
      %p42 = scmp.eq.s32.totalorder %s20, 1
      %p43 = por %p41, %p42
      %p45 = scmp.ne.s32.totalorder %s28, %s44
      %p46 = scmp.eq.s32.totalorder %s20, 0
      %p47 = por %p45, %p46
      %s48 = ssub.s32 %s14, %s21
      %p49 = scmp.eq.s32.totalorder %s48, 0
      %s51 = sadd.s32 %s50, 1
      %s52 = scalar_select %p49, %s50, %s51
      %p55 = pneg %p49
      %p56 = scmp.eq.s32.totalorder %s14, 1
      %p57 = por %p55, %p56
      %p58 = scmp.ne.s32.totalorder %s50, %s53
      %p59 = scmp.eq.s32.totalorder %s14, 0
      %p60 = por %p58, %p59
      %p61 = scmp.ne.s32.totalorder %s50, %s53
      %p62 = scmp.eq.s32.totalorder %s19, 1
      %p63 = por %p61, %p62
      %p64 = scmp.ne.s32.totalorder %s53, %s54
      %p65 = scmp.eq.s32.totalorder %s19, 0
      %p66 = por %p64, %p65
      %p67 = scmp.ne.s32.totalorder %s53, %s54
      %p68 = scmp.eq.s32.totalorder %s20, 1
      %p69 = por %p67, %p68
      %p71 = scmp.ne.s32.totalorder %s54, %s70
      %p72 = scmp.eq.s32.totalorder %s20, 0
      %p73 = por %p71, %p72
      %s74 = ssub.s32 %s14, %s21
      %p75 = scmp.eq.s32.totalorder %s74, 0
      %s77 = sadd.s32 %s76, 1
      %s78 = scalar_select %p75, %s76, %s77
      %p81 = pneg %p75
      %p82 = scmp.eq.s32.totalorder %s14, 1
      %p83 = por %p81, %p82
      %p84 = scmp.ne.s32.totalorder %s76, %s79
      %p85 = scmp.eq.s32.totalorder %s14, 0
      %p86 = por %p84, %p85
      %p87 = scmp.ne.s32.totalorder %s76, %s79
      %p88 = scmp.eq.s32.totalorder %s19, 1
      %p89 = por %p87, %p88
      %p90 = scmp.ne.s32.totalorder %s79, %s80
      %p91 = scmp.eq.s32.totalorder %s19, 0
      %p92 = por %p90, %p91
      %p93 = scmp.ne.s32.totalorder %s79, %s80
      %p94 = scmp.eq.s32.totalorder %s20, 1
      %p95 = por %p93, %p94
      %p97 = scmp.ne.s32.totalorder %s80, %s96
      %p98 = scmp.eq.s32.totalorder %s20, 0
      %p99 = por %p97, %p98
      %p100 = scmp.le.s32.totalorder 1, %s14
      %p101 = scmp.lt.s32.totalorder %s14, 3
      %p102 = pnand %p100, %p101
      %p103 = pneg %p102
      // Predicated region
      $region9: #{tpu_custom_call.1} parent=5 // pred_check
        _
      $region10: #{tpu_custom_call.1} parent=5 // pred_check_branch
        %105 = sbr.rel (%p102) target = $region12
      $region11: #{tpu_custom_call.1} parent=5 // pred_region
        %s106 = ssub.s32 %s14, 1
      $region12: #{tpu_custom_call.1} parent=5 // pred_fallthru
        _
      %p107 = scmp.lt.s32.totalorder %s14, 2
      // Predicated region
      $region13: #{tpu_custom_call.1} parent=5 // pred_check
        %p108 = pneg %p107
      $region14: #{tpu_custom_call.1} parent=5 // pred_check_branch
        %110 = sbr.rel (%p108) target = $region16
      $region15: #{tpu_custom_call.1} parent=5 // pred_region
        // Predicated region
        $region17: #{tpu_custom_call.1} parent=15 // pred_check
          %p111 = pneg %p34
        $region18: #{tpu_custom_call.1} parent=15 // pred_check_branch
          %113 = sbr.rel (%p111) target = $region20
        $region19: #{tpu_custom_call.1} parent=15 // pred_region
          %s114 = sand.u32 %s24, 1
          %s115 = scalar_lea.sflag [#allocation4], %s114
          %s116 = sand.u32 %s24, 1
          %s117 = smul.addr %s116, 64
          %s118 = scalar_lea.vmem [#allocation3], %s117
          %s119 = smul.u32 4, %s14
          %s121 = ssub.s32 1024, 1024
          %122 = vsyncadd %s115, %s121
          %s123 = smul.addr %s119, 2
          %s124 = smul.addr %s123, 128
          %s125 = scalar_lea.hbm %s0, %s124
          %s126 = sshll.u32 %s118, 4
          %s127 = int_to_ptr.vmem [resolvable:$true] %s126
          %132 = dma.hbm_to_vmem [thread:$0]  %s125, 1024, %s127, %s115, 128, 128, 8
        $region20: #{tpu_custom_call.1} parent=15 // pred_fallthru
          _
        // Predicated region
        $region21: #{tpu_custom_call.1} parent=15 // pred_check
          %p133 = pneg %p60
        $region22: #{tpu_custom_call.1} parent=15 // pred_check_branch
          %135 = sbr.rel (%p133) target = $region24
        $region23: #{tpu_custom_call.1} parent=15 // pred_region
          %s136 = smul.u32 4, %s14
          %p137 = scmp.lt.s32.totalorder %s136, 7
          %s138 = scalar_select %p137, %s136, 7
          %s139 = smul.addr %s138, 4
          %s140 = scalar_lea.vmem %s1, %s139
          %s141 = smul.u32 4, %s14
        $region24: #{tpu_custom_call.1} parent=15 // pred_fallthru
          _
      $region16: #{tpu_custom_call.1} parent=5 // pred_fallthru
        _
      %p142 = scmp.le.s32.totalorder 1, %s14
      %p143 = scmp.lt.s32.totalorder %s14, 3
      %p144 = pnand %p142, %p143
      %p145 = pneg %p144
      // Predicated region
      $region25: #{tpu_custom_call.1} parent=5 // pred_check
        _
      $region26: #{tpu_custom_call.1} parent=5 // pred_check_branch
        %147 = sbr.rel (%p144) target = $region28
      $region27: #{tpu_custom_call.1} parent=5 // pred_region
        %s148 = ssub.s32 %s14, 1
        %s149 = sand.u32 %s27, 1
        %s150 = scalar_lea.sflag [#allocation4], %s149
        %s151 = sand.u32 %s27, 1
        %s152 = smul.addr %s151, 64
        %s153 = scalar_lea.vmem [#allocation3], %s152
        // Predicated region
        $region29: #{tpu_custom_call.1} parent=27 // pred_check
          %p154 = pneg %p40
        $region30: #{tpu_custom_call.1} parent=27 // pred_check_branch
          %156 = sbr.rel (%p154) target = $region32
        $region31: #{tpu_custom_call.1} parent=27 // pred_region
          %157 = dma.done %s150, 1024
        $region32: #{tpu_custom_call.1} parent=27 // pred_fallthru
          _
        %s158 = sand.u32 %s27, 1
        %s159 = scalar_lea.sflag [#allocation4], %s158
        %s160 = sand.u32 %s27, 1
        %s161 = smul.addr %s160, 64
        %s162 = scalar_lea.vmem [#allocation3], %s161
        %p163 = pneg %p40
        %p164 = pneg %p37
        %s165 = smul.u32 4, %s19
        %p166 = scmp.lt.s32.totalorder %s165, 7
        %s167 = scalar_select %p166, %s165, 7
        %s168 = smul.addr %s167, 4
        %s169 = scalar_lea.vmem %s1, %s168
        %p170 = pneg %p66
        %p171 = pneg %p63
        %p172 = pneg %p92
        %p173 = pneg %p89
        %s174 = sand.u32 %s79, 1
        %s175 = scalar_lea.sflag [#allocation5], %s174
        %s176 = sand.u32 %s79, 1
        %s177 = smul.addr %s176, 64
        %s178 = scalar_lea.vmem [#allocation6], %s177
        %s179 = smul.u32 4, %s19
        %s180 = smul.u32 4, %s19
        %p181 = scmp.lt.s32.totalorder %s180, 7
        %s182 = scalar_select %p181, %s180, 7
        %s183 = smul.addr %s182, 4
        %s184 = scalar_lea.vmem %s1, %s183
        %s185 = smul.u32 4, %s19
        %s186 = smul.u32 4, %s19
        %vm187 = vcmask 139264
        %188 = vst.msk [vmem:[#allocation2] sm:$0x1] %vm187, 0.0
        %189 = vst.msk [vmem:[#allocation2 + $0x18] sm:$0x1] %vm187, 0.0
        %190 = vst.msk [vmem:[#allocation2 + $0x30] sm:$0x1] %vm187, 0.0
        %191 = vst.msk [vmem:[#allocation2 + $0x48] sm:$0x1] %vm187, 0.0
        %192 = vst.msk [vmem:[#allocation2 + $0x11] sm:$0x1] %vm187, 0.0
        %193 = vst.msk [vmem:[#allocation2 + $0x29] sm:$0x1] %vm187, 0.0
        %194 = vst.msk [vmem:[#allocation2 + $0x41] sm:$0x1] %vm187, 0.0
        %195 = vst.msk [vmem:[#allocation2 + $0x59] sm:$0x1] %vm187, 0.0
        %vm196 = vcmask 7168
        %197 = vst.msk [vmem:[#allocation2] sm:$0xff] %vm196, 0.0
        %198 = vst.msk [vmem:[#allocation2 + $0x8] sm:$0xff] %vm196, 0.0
        %vm199 = vcmask 1024
        %200 = vst.msk [vmem:[#allocation2 + $0x10] sm:$0x3] %vm199, 0.0
        %201 = vst.msk [vmem:[#allocation2 + $0x18] sm:$0xff] %vm196, 0.0
        %202 = vst.msk [vmem:[#allocation2 + $0x20] sm:$0xff] %vm196, 0.0
        %203 = vst.msk [vmem:[#allocation2 + $0x28] sm:$0x3] %vm199, 0.0
        %204 = vst.msk [vmem:[#allocation2 + $0x30] sm:$0xff] %vm196, 0.0
        %205 = vst.msk [vmem:[#allocation2 + $0x38] sm:$0xff] %vm196, 0.0
        %206 = vst.msk [vmem:[#allocation2 + $0x40] sm:$0x3] %vm199, 0.0
        %207 = vst.msk [vmem:[#allocation2 + $0x48] sm:$0xff] %vm196, 0.0
        %208 = vst.msk [vmem:[#allocation2 + $0x50] sm:$0xff] %vm196, 0.0
        %209 = vst.msk [vmem:[#allocation2 + $0x58] sm:$0x3] %vm199, 0.0
        %vm210 = vcmask 146568
        %211 = vst.msk [vmem:[#allocation2] sm:$0xff] %vm210, 0.0
        %212 = vst.msk [vmem:[#allocation2 + $0x8] sm:$0xff] %vm210, 0.0
        %vm213 = vcmask 140424
        %214 = vst.msk [vmem:[#allocation2 + $0x10] sm:$0x3] %vm213, 0.0
        %215 = vst.msk [vmem:[#allocation2 + $0x18] sm:$0xff] %vm210, 0.0
        %216 = vst.msk [vmem:[#allocation2 + $0x20] sm:$0xff] %vm210, 0.0
        %217 = vst.msk [vmem:[#allocation2 + $0x28] sm:$0x3] %vm213, 0.0
        %218 = vst.msk [vmem:[#allocation2 + $0x30] sm:$0xff] %vm210, 0.0
        %219 = vst.msk [vmem:[#allocation2 + $0x38] sm:$0xff] %vm210, 0.0
        %220 = vst.msk [vmem:[#allocation2 + $0x40] sm:$0x3] %vm213, 0.0
        %221 = vst.msk [vmem:[#allocation2 + $0x48] sm:$0xff] %vm210, 0.0
        %222 = vst.msk [vmem:[#allocation2 + $0x50] sm:$0xff] %vm210, 0.0
        %223 = vst.msk [vmem:[#allocation2 + $0x58] sm:$0x3] %vm213, 0.0
        %v224 = vld [vmem:[%s153] sm:$0xff]
        %v225 = vld [vmem:[%s153 + $0x8] sm:$0xff]
        %v226 = vld [vmem:[%s153 + $0x10] sm:$0xff]
        %v227 = vld [vmem:[%s153 + $0x18] sm:$0xff]
        %v228 = vld [vmem:[%s153 + $0x20] sm:$0xff]
        %v229 = vld [vmem:[%s153 + $0x28] sm:$0xff]
        %v230 = vld [vmem:[%s153 + $0x30] sm:$0xff]
        %v231 = vld [vmem:[%s153 + $0x38] sm:$0xff]
        %240 = vrot.lane.b32.xlu0 %v224, 1
        %v241 = vpop.permute.xlu0 %240
        %242 = vrot.lane.b32.xlu0 %v225, 1
        %v243 = vpop.permute.xlu0 %242
        %244 = vrot.lane.b32.xlu0 %v226, 1
        %v245 = vpop.permute.xlu0 %244
        %246 = vrot.lane.b32.xlu0 %v227, 1
        %v247 = vpop.permute.xlu0 %246
        %248 = vrot.lane.b32.xlu0 %v228, 1
        %v249 = vpop.permute.xlu0 %248
        %250 = vrot.lane.b32.xlu0 %v229, 1
        %v251 = vpop.permute.xlu0 %250
        %252 = vrot.lane.b32.xlu0 %v230, 1
        %v253 = vpop.permute.xlu0 %252
        %254 = vrot.lane.b32.xlu0 %v231, 1
        %v255 = vpop.permute.xlu0 %254
        %vm264 = vcmask 138248
        %265 = vst.msk [vmem:[#allocation2 + $0x1] sm:$0xff] %vm264, %v241
        %266 = vst.msk [vmem:[#allocation2 + $0x9] sm:$0xff] %vm264, %v243
        %267 = vst.msk [vmem:[#allocation2 + $0x19] sm:$0xff] %vm264, %v245
        %268 = vst.msk [vmem:[#allocation2 + $0x21] sm:$0xff] %vm264, %v247
        %269 = vst.msk [vmem:[#allocation2 + $0x31] sm:$0xff] %vm264, %v249
        %270 = vst.msk [vmem:[#allocation2 + $0x39] sm:$0xff] %vm264, %v251
        %271 = vst.msk [vmem:[#allocation2 + $0x49] sm:$0xff] %vm264, %v253
        %272 = vst.msk [vmem:[#allocation2 + $0x51] sm:$0xff] %vm264, %v255
        %v273 = vld [vmem:[#allocation2] sm:$0xff]
        %v274 = vld [vmem:[#allocation2 + $0x8] sm:$0xff]
        %v275 = vld [vmem:[#allocation2 + $0x18] sm:$0xff]
        %v276 = vld [vmem:[#allocation2 + $0x20] sm:$0xff]
        %v277 = vld [vmem:[#allocation2 + $0x30] sm:$0xff]
        %v278 = vld [vmem:[#allocation2 + $0x38] sm:$0xff]
        %v279 = vld [vmem:[#allocation2 + $0x48] sm:$0xff]
        %v280 = vld [vmem:[#allocation2 + $0x50] sm:$0xff]
        %289 = vrot.lane.b32.xlu0 %v273, 127
        %v290 = vpop.permute.xlu0 %289
        %291 = vrot.lane.b32.xlu0 %v274, 127
        %v292 = vpop.permute.xlu0 %291
        %293 = vrot.lane.b32.xlu0 %v275, 127
        %v294 = vpop.permute.xlu0 %293
        %295 = vrot.lane.b32.xlu0 %v276, 127
        %v296 = vpop.permute.xlu0 %295
        %297 = vrot.lane.b32.xlu0 %v277, 127
        %v298 = vpop.permute.xlu0 %297
        %299 = vrot.lane.b32.xlu0 %v278, 127
        %v300 = vpop.permute.xlu0 %299
        %301 = vrot.lane.b32.xlu0 %v279, 127
        %v302 = vpop.permute.xlu0 %301
        %303 = vrot.lane.b32.xlu0 %v280, 127
        %v304 = vpop.permute.xlu0 %303
        %v313 = vadd.f32 %v273, %v290
        %v314 = vadd.f32 %v274, %v292
        %v315 = vadd.f32 %v275, %v294
        %v316 = vadd.f32 %v276, %v296
        %v317 = vadd.f32 %v277, %v298
        %v318 = vadd.f32 %v278, %v300
        %v319 = vadd.f32 %v279, %v302
        %v320 = vadd.f32 %v280, %v304
        %321 = vrot.lane.b32.xlu0 %v273, 126
        %v322 = vpop.permute.xlu0 %321
        %323 = vrot.lane.b32.xlu0 %v274, 126
        %v324 = vpop.permute.xlu0 %323
        %325 = vrot.lane.b32.xlu0 %v275, 126
        %v326 = vpop.permute.xlu0 %325
        %327 = vrot.lane.b32.xlu0 %v276, 126
        %v328 = vpop.permute.xlu0 %327
        %329 = vrot.lane.b32.xlu0 %v277, 126
        %v330 = vpop.permute.xlu0 %329
        %331 = vrot.lane.b32.xlu0 %v278, 126
        %v332 = vpop.permute.xlu0 %331
        %333 = vrot.lane.b32.xlu0 %v279, 126
        %v334 = vpop.permute.xlu0 %333
        %335 = vrot.lane.b32.xlu0 %v280, 126
        %v336 = vpop.permute.xlu0 %335
        %v345 = vadd.f32 %v313, %v322
        %v346 = vadd.f32 %v314, %v324
        %v347 = vadd.f32 %v315, %v326
        %v348 = vadd.f32 %v316, %v328
        %v349 = vadd.f32 %v317, %v330
        %v350 = vadd.f32 %v318, %v332
        %v351 = vadd.f32 %v319, %v334
        %v352 = vadd.f32 %v320, %v336
        %v353 = vld [vmem:[#allocation2 + $0x1] sm:$0xff]
        %v354 = vld [vmem:[#allocation2 + $0x9] sm:$0xff]
        %v355 = vld [vmem:[#allocation2 + $0x19] sm:$0xff]
        %v356 = vld [vmem:[#allocation2 + $0x21] sm:$0xff]
        %v357 = vld [vmem:[#allocation2 + $0x31] sm:$0xff]
        %v358 = vld [vmem:[#allocation2 + $0x39] sm:$0xff]
        %v359 = vld [vmem:[#allocation2 + $0x49] sm:$0xff]
        %v360 = vld [vmem:[#allocation2 + $0x51] sm:$0xff]
        %v361 = vadd.f32 %v345, %v353
        %v362 = vadd.f32 %v346, %v354
        %v363 = vadd.f32 %v347, %v355
        %v364 = vadd.f32 %v348, %v356
        %v365 = vadd.f32 %v349, %v357
        %v366 = vadd.f32 %v350, %v358
        %v367 = vadd.f32 %v351, %v359
        %v368 = vadd.f32 %v352, %v360
        %377 = vrot.lane.b32.xlu0 %v353, 127
        %v378 = vpop.permute.xlu0 %377
        %379 = vrot.lane.b32.xlu0 %v354, 127
        %v380 = vpop.permute.xlu0 %379
        %381 = vrot.lane.b32.xlu0 %v355, 127
        %v382 = vpop.permute.xlu0 %381
        %383 = vrot.lane.b32.xlu0 %v356, 127
        %v384 = vpop.permute.xlu0 %383
        %385 = vrot.lane.b32.xlu0 %v357, 127
        %v386 = vpop.permute.xlu0 %385
        %387 = vrot.lane.b32.xlu0 %v358, 127
        %v388 = vpop.permute.xlu0 %387
        %389 = vrot.lane.b32.xlu0 %v359, 127
        %v390 = vpop.permute.xlu0 %389
        %391 = vrot.lane.b32.xlu0 %v360, 127
        %v392 = vpop.permute.xlu0 %391
        %v401 = vadd.f32 %v361, %v378
        %v402 = vadd.f32 %v362, %v380
        %v403 = vadd.f32 %v363, %v382
        %v404 = vadd.f32 %v364, %v384
        %v405 = vadd.f32 %v365, %v386
        %v406 = vadd.f32 %v366, %v388
        %v407 = vadd.f32 %v367, %v390
        %v408 = vadd.f32 %v368, %v392
        %409 = vrot.lane.b32.xlu0 %v353, 126
        %v410 = vpop.permute.xlu0 %409
        %411 = vrot.lane.b32.xlu0 %v354, 126
        %v412 = vpop.permute.xlu0 %411
        %413 = vrot.lane.b32.xlu0 %v355, 126
        %v414 = vpop.permute.xlu0 %413
        %415 = vrot.lane.b32.xlu0 %v356, 126
        %v416 = vpop.permute.xlu0 %415
        %417 = vrot.lane.b32.xlu0 %v357, 126
        %v418 = vpop.permute.xlu0 %417
        %419 = vrot.lane.b32.xlu0 %v358, 126
        %v420 = vpop.permute.xlu0 %419
        %421 = vrot.lane.b32.xlu0 %v359, 126
        %v422 = vpop.permute.xlu0 %421
        %423 = vrot.lane.b32.xlu0 %v360, 126
        %v424 = vpop.permute.xlu0 %423
        %v433 = vadd.f32 %v401, %v410
        %v434 = vadd.f32 %v402, %v412
        %v435 = vadd.f32 %v403, %v414
        %v436 = vadd.f32 %v404, %v416
        %v437 = vadd.f32 %v405, %v418
        %v438 = vadd.f32 %v406, %v420
        %v439 = vadd.f32 %v407, %v422
        %v440 = vadd.f32 %v408, %v424
        %v441 = vld [vmem:[#allocation2 + $0x2] sm:$0xff]
        %v442 = vld [vmem:[#allocation2 + $0xa] sm:$0xff]
        %v443 = vld [vmem:[#allocation2 + $0x1a] sm:$0xff]
        %v444 = vld [vmem:[#allocation2 + $0x22] sm:$0xff]
        %v445 = vld [vmem:[#allocation2 + $0x32] sm:$0xff]
        %v446 = vld [vmem:[#allocation2 + $0x3a] sm:$0xff]
        %v447 = vld [vmem:[#allocation2 + $0x4a] sm:$0xff]
        %v448 = vld [vmem:[#allocation2 + $0x52] sm:$0xff]
        %v449 = vadd.f32 %v433, %v441
        %v450 = vadd.f32 %v434, %v442
        %v451 = vadd.f32 %v435, %v443
        %v452 = vadd.f32 %v436, %v444
        %v453 = vadd.f32 %v437, %v445
        %v454 = vadd.f32 %v438, %v446
        %v455 = vadd.f32 %v439, %v447
        %v456 = vadd.f32 %v440, %v448
        %465 = vrot.lane.b32.xlu0 %v441, 127
        %v466 = vpop.permute.xlu0 %465
        %467 = vrot.lane.b32.xlu0 %v442, 127
        %v468 = vpop.permute.xlu0 %467
        %469 = vrot.lane.b32.xlu0 %v443, 127
        %v470 = vpop.permute.xlu0 %469
        %471 = vrot.lane.b32.xlu0 %v444, 127
        %v472 = vpop.permute.xlu0 %471
        %473 = vrot.lane.b32.xlu0 %v445, 127
        %v474 = vpop.permute.xlu0 %473
        %475 = vrot.lane.b32.xlu0 %v446, 127
        %v476 = vpop.permute.xlu0 %475
        %477 = vrot.lane.b32.xlu0 %v447, 127
        %v478 = vpop.permute.xlu0 %477
        %479 = vrot.lane.b32.xlu0 %v448, 127
        %v480 = vpop.permute.xlu0 %479
        %v489 = vadd.f32 %v449, %v466
        %v490 = vadd.f32 %v450, %v468
        %v491 = vadd.f32 %v451, %v470
        %v492 = vadd.f32 %v452, %v472
        %v493 = vadd.f32 %v453, %v474
        %v494 = vadd.f32 %v454, %v476
        %v495 = vadd.f32 %v455, %v478
        %v496 = vadd.f32 %v456, %v480
        %497 = vrot.lane.b32.xlu0 %v441, 126
        %v498 = vpop.permute.xlu0 %497
        %499 = vrot.lane.b32.xlu0 %v442, 126
        %v500 = vpop.permute.xlu0 %499
        %501 = vrot.lane.b32.xlu0 %v443, 126
        %v502 = vpop.permute.xlu0 %501
        %503 = vrot.lane.b32.xlu0 %v444, 126
        %v504 = vpop.permute.xlu0 %503
        %505 = vrot.lane.b32.xlu0 %v445, 126
        %v506 = vpop.permute.xlu0 %505
        %507 = vrot.lane.b32.xlu0 %v446, 126
        %v508 = vpop.permute.xlu0 %507
        %509 = vrot.lane.b32.xlu0 %v447, 126
        %v510 = vpop.permute.xlu0 %509
        %511 = vrot.lane.b32.xlu0 %v448, 126
        %v512 = vpop.permute.xlu0 %511
        %v521 = vadd.f32 %v489, %v498
        %v522 = vadd.f32 %v490, %v500
        %v523 = vadd.f32 %v491, %v502
        %v524 = vadd.f32 %v492, %v504
        %v525 = vadd.f32 %v493, %v506
        %v526 = vadd.f32 %v494, %v508
        %v527 = vadd.f32 %v495, %v510
        %v528 = vadd.f32 %v496, %v512
        %v529 = vmul.f32 %v521, 0.11111111
        %v530 = vmul.f32 %v522, 0.11111111
        %v531 = vmul.f32 %v523, 0.11111111
        %v532 = vmul.f32 %v524, 0.11111111
        %v533 = vmul.f32 %v525, 0.11111111
        %v534 = vmul.f32 %v526, 0.11111111
        %v535 = vmul.f32 %v527, 0.11111111
        %v536 = vmul.f32 %v528, 0.11111111
        %vm537 = vcmask 130048
        %538 = vst.msk [vmem:[%s178] sm:$0xff] %vm537, %v529
        %539 = vst.msk [vmem:[%s178 + $0x8] sm:$0xff] %vm537, %v530
        %540 = vst.msk [vmem:[%s178 + $0x10] sm:$0xff] %vm537, %v531
        %541 = vst.msk [vmem:[%s178 + $0x18] sm:$0xff] %vm537, %v532
        %542 = vst.msk [vmem:[%s178 + $0x20] sm:$0xff] %vm537, %v533
        %543 = vst.msk [vmem:[%s178 + $0x28] sm:$0xff] %vm537, %v534
        %544 = vst.msk [vmem:[%s178 + $0x30] sm:$0xff] %vm537, %v535
        %545 = vst.msk [vmem:[%s178 + $0x38] sm:$0xff] %vm537, %v536
        %s546 = sand.u32 %s79, 1
        %s547 = scalar_lea.sflag [#allocation5], %s546
        %s548 = sand.u32 %s79, 1
        %s549 = smul.addr %s548, 64
        %s550 = scalar_lea.vmem [#allocation6], %s549
        // Predicated region
        $region33: #{tpu_custom_call.1} parent=27 // pred_check
          %p551 = pneg %p89
        $region34: #{tpu_custom_call.1} parent=27 // pred_check_branch
          %553 = sbr.rel (%p551) target = $region36
        $region35: #{tpu_custom_call.1} parent=27 // pred_region
          %s554 = smul.u32 4, %s19
          %s556 = ssub.s32 1024, 1024
          %557 = vsyncadd %s547, %s556
          %s558 = smul.addr %s554, 2
          %s559 = smul.addr %s558, 128
          %s560 = scalar_lea.hbm %s2, %s559
          %s561 = sshll.u32 %s550, 4
          %s562 = int_to_ptr.vmem [resolvable:$true] %s561
          %567 = dma.vmem_to_hbm [thread:$0]  %s562, 1024, %s560, %s547, 128, 128, 8
        $region36: #{tpu_custom_call.1} parent=27 // pred_fallthru
          _
      $region28: #{tpu_custom_call.1} parent=5 // pred_fallthru
        _
      %p568 = scmp.le.s32.totalorder 2, %s14
      // Predicated region
      $region37: #{tpu_custom_call.1} parent=5 // pred_check
        %p569 = pneg %p568
      $region38: #{tpu_custom_call.1} parent=5 // pred_check_branch
        %571 = sbr.rel (%p569) target = $region40
      $region39: #{tpu_custom_call.1} parent=5 // pred_region
        %s572 = ssub.s32 %s14, 2
        // Predicated region
        $region41: #{tpu_custom_call.1} parent=39 // pred_check
          %p573 = pneg %p95
        $region42: #{tpu_custom_call.1} parent=39 // pred_check_branch
          %575 = sbr.rel (%p573) target = $region44
        $region43: #{tpu_custom_call.1} parent=39 // pred_region
          %s576 = sand.u32 %s80, 1
          %s577 = scalar_lea.sflag [#allocation5], %s576
          %s578 = sand.u32 %s80, 1
          %s579 = smul.addr %s578, 64
          %s580 = scalar_lea.vmem [#allocation6], %s579
          %581 = dma.done %s577, 1024
        $region44: #{tpu_custom_call.1} parent=39 // pred_fallthru
          _
      $region40: #{tpu_custom_call.1} parent=5 // pred_fallthru
        _
    $region6: #{tpu_custom_call.1} parent=1 // loop_footer
      %s18 = sadd.s32 1, %s14
    $region7: #{tpu_custom_call.1} parent=1 // loop_footer_branch
      %13 = sbr.rel target = $region3
    $region8: #{tpu_custom_call.1} parent=1 // loop_exit
      _
    %582 = vsyncpa [#allocation4], 1
    %s583 = scalar_lea.sflag [#allocation4], 1
    %584 = vsyncpa %s583, 1
    %585 = vsyncpa [#allocation5], 1
    %s586 = scalar_lea.sflag [#allocation5], 1
    %587 = vsyncpa %s586, 1

</llo_original>
